<compile_context>
chip_gen: v6e
topology: v6e:2x2x1
jax: 0.10.0
libtpu: 0.0.40
codegen_flags: <defaults>
</compile_context>

<pallas_src>
import math

import jax
import jax.numpy as jnp
from jax.experimental import pallas as pl
from jax.experimental.pallas import tpu as pltpu


def _round_up(n, m):
    return ((n + m - 1) // m) * m


def _vmem_cap_bytes():
    # Physical VMEM of the attached chip; fall back to the smallest per-TC VMEM
    # across supported generations (v7x: 64 MiB) if the query is unavailable.
    try:
        cap = int(pltpu.get_tpu_info().vmem_capacity_bytes)
        if cap > 0:
            return cap
    except Exception:
        pass
    return 64 * 1024 * 1024


_SQRT_HALF = 1.0 / math.sqrt(2.0)


# ----------------------------- kernels ------------------------------------


def _make_mlp_kernel(matmul_dtype):
    """matmul_dtype=None -> f32 MXU operands (bit-exact vs f32 ref);
    matmul_dtype=jnp.bfloat16 -> bf16 MXU operands, f32 accumulation (fast path)."""

    def kernel(x_ref, w1_ref, b1_ref, w2_ref, b2_ref, o_ref):
        x = x_ref[...]
        w1 = w1_ref[...]
        w2 = w2_ref[...]
        if matmul_dtype is not None:
            x = x.astype(matmul_dtype)
            w1 = w1.astype(matmul_dtype)
            w2 = w2.astype(matmul_dtype)
        h = jnp.dot(x, w1, preferred_element_type=jnp.float32)
        h = h + b1_ref[...].astype(jnp.float32)
        # exact GELU to match torch.nn.functional.gelu (default, non-tanh)
        h = 0.5 * h * (1.0 + jax.lax.erf(h * _SQRT_HALF))
        if matmul_dtype is not None:
            h = h.astype(matmul_dtype)
        y = jnp.dot(h, w2, preferred_element_type=jnp.float32)
        y = y + b2_ref[...].astype(jnp.float32)
        o_ref[...] = y.astype(o_ref.dtype)

    return kernel


def _normalize_kernel(x_ref, o_ref):
    # F.normalize(x, dim=1, p=2): x / max(||x||_2, 1e-12) along feature dim.
    # 1/max(||x||, 1e-12) == rsqrt(max(||x||^2, 1e-24)) -> EUP path, no vector divide.
    x = x_ref[...].astype(jnp.float32)
    sq = jnp.sum(x * x, axis=1, keepdims=True)
    inv = jax.lax.rsqrt(jnp.maximum(sq, 1e-24))
    o_ref[...] = (x * inv).astype(o_ref.dtype)


# ----------------------------- wrappers ------------------------------------


def pad_mlp_params(w1_t, b1, w2_t, b2):
    """ONE-TIME pre-padding of weights/biases to lane-dense (multiple-of-128) shapes.

    Call once at init and reuse the result; padding weights inside the per-call
    wrapper would re-write them to HBM on every call.
    """
    D, H = w1_t.shape
    O = w2_t.shape[1]
    Dp, Hp, Op = _round_up(D, 128), _round_up(H, 128), _round_up(O, 128)
    dt = w1_t.dtype
    if (Dp, Hp) != (D, H):
        w1_t = jnp.zeros((Dp, Hp), dt).at[:D, :H].set(w1_t)
    if Hp != H:
        b1 = jnp.zeros((1, Hp), dt).at[:, :H].set(b1)
    if (Hp, Op) != (H, O):
        w2_t = jnp.zeros((Hp, Op), dt).at[:H, :O].set(w2_t)
    if Op != O:
        b2 = jnp.zeros((1, Op), dt).at[:, :O].set(b2)
    return (w1_t, b1, w2_t, b2, (D, H, O))


def _batch_tile(B, block_b):
    """Batch tile multiple of 8 sublanes; at B>=512 guarantee >=2 grid steps
    (multiple of 256) so 'parallel' can shard across v7x's two TensorCores."""
    TB = min(block_b, _round_up(B, 8))
    Bp = _round_up(B, TB)
    if Bp // TB == 1 and B >= 512:
        TB = max(256, (TB // 2) // 256 * 256)
        Bp = _round_up(B, TB)
    return TB, Bp


def property_regressor_mlp(x, padded_params, *, block_b=512, matmul_dtype=None):
    """x: [B, D]; padded_params from pad_mlp_params(...) -> [B, output_dim]."""
    w1p, b1p, w2p, b2p, (D, H, O) = padded_params
    B, Dx = x.shape
    assert Dx == D, f"feature dim mismatch: {Dx} vs {D}"
    Dp, Hp = w1p.shape
    Op = w2p.shape[1]
    dtype = x.dtype

    TB, Bp = _batch_tile(B, block_b)

    # pad x only when strictly needed (aligned shapes skip the extra HBM round trip)
    if Bp != B or Dp != D:
        xp = jnp.zeros((Bp, Dp), dtype).at[:B, :D].set(x)
    else:
        xp = x

    # VMEM budget: Pallas double-buffers *every* input block, including the
    # "resident" weights/biases, so count them twice.  1.5x headroom, capped at
    # 85% of physical VMEM (~54 MiB v7x, ~108 MiB v5e/v6e).
    itemsize = jnp.dtype(dtype).itemsize
    vmem_bytes = (
        2 * (TB * Dp + TB * Op) * itemsize              # double-buffered x / out tiles
        + 2 * (Dp * Hp + Hp * Op + Hp + Op) * itemsize  # weights+biases (2 buffers each)
        + TB * Hp * 4                                   # f32 GELU intermediate
    )
    cap = int(0.85 * _vmem_cap_bytes())
    vmem_limit = min(max(int(1.5 * vmem_bytes), 16 * 1024 * 1024), cap)

    out = pl.pallas_call(
        _make_mlp_kernel(matmul_dtype),
        out_shape=jax.ShapeDtypeStruct((Bp, Op), dtype),
        grid_spec=pltpu.PrefetchScalarGridSpec(
            num_scalar_prefetch=0,
            grid=(Bp // TB,),
            in_specs=[
                pl.BlockSpec((TB, Dp), lambda i: (i, 0)),   # x tile (pipelined over batch)
                pl.BlockSpec((Dp, Hp), lambda i: (0, 0)),   # w1 resident
                pl.BlockSpec((1, Hp), lambda i: (0, 0)),    # b1 resident
                pl.BlockSpec((Hp, Op), lambda i: (0, 0)),   # w2 resident
                pl.BlockSpec((1, Op), lambda i: (0, 0)),    # b2 resident
            ],
            out_specs=pl.BlockSpec((TB, Op), lambda i: (i, 0)),
        ),
        compiler_params=pltpu.CompilerParams(
            dimension_semantics=("parallel",),
            vmem_limit_bytes=vmem_limit,
        ),
    )(xp, w1p, b1p, w2p, b2p)

    if Bp != B or Op != O:
        out = out[:B, :O]
    return out


def property_regressor_normalize(x, *, block_b=1024):
    """x: [B, D] -> L2-normalized along dim=1 (eps = 1e-12)."""
    B, D = x.shape
    dtype = x.dtype
    Dp = _round_up(D, 128)

    TB, Bp = _batch_tile(B, block_b)

    if Bp != B or Dp != D:
        xp = jnp.zeros((Bp, Dp), dtype).at[:B, :D].set(x)
    else:
        xp = x

    # in + out tiles, double-buffered; 2x headroom; capped at 85% physical VMEM.
    itemsize = jnp.dtype(dtype).itemsize
    vmem_bytes = 2 * 2 * TB * Dp * itemsize
    cap = int(0.85 * _vmem_cap_bytes())
    vmem_limit = min(max(2 * vmem_bytes, 16 * 1024 * 1024), cap)

    out = pl.pallas_call(
        _normalize_kernel,
        out_shape=jax.ShapeDtypeStruct((Bp, Dp), dtype),
        grid_spec=pltpu.PrefetchScalarGridSpec(
            num_scalar_prefetch=0,
            grid=(Bp // TB,),
            in_specs=[pl.BlockSpec((TB, Dp), lambda i: (i, 0))],
            out_specs=pl.BlockSpec((TB, Dp), lambda i: (i, 0)),
        ),
        compiler_params=pltpu.CompilerParams(
            dimension_semantics=("parallel",),
            vmem_limit_bytes=vmem_limit,
        ),
    )(xp)

    if Bp != B or Dp != D:
        out = out[:B, :D]
    return out


# -------------------------- parameter init ---------------------------------


def _xavier_uniform(key, out_dim, in_dim, dtype=jnp.float32):
    bound = math.sqrt(6.0 / (in_dim + out_dim))
    # torch stores Linear weight as (out, in); we return its transpose for x @ W^T
    w = jax.random.uniform(key, (out_dim, in_dim), dtype, -bound, bound)
    return w.T  # (in, out)


def _linear_bias(key, out_dim, in_dim, dtype=jnp.float32):
    # PyTorch Linear default bias init: U(-1/sqrt(fan_in), 1/sqrt(fan_in))
    bound = 1.0 / math.sqrt(in_dim)
    return jax.random.uniform(key, (1, out_dim), dtype, -bound, bound)


def init_property_regressor(key, decoder_dim, output_dim, dtype=jnp.float32):
    if output_dim == -1:
        return None  # just_normalize mode: no params
    k1, k2, k3, k4 = jax.random.split(key, 4)
    hidden = decoder_dim * 2
    w1_t = _xavier_uniform(k1, hidden, decoder_dim, dtype)       # (D, 2D)
    b1 = _linear_bias(k2, hidden, decoder_dim, dtype)            # (1, 2D)
    w2_t = _xavier_uniform(k3, output_dim, hidden, dtype)        # (2D, O)
    b2 = _linear_bias(k4, output_dim, hidden, dtype)             # (1, O)
    return (w1_t, b1, w2_t, b2)


# ---------------------------- pure-JAX refs ---------------------------------


def _mlp_ref(x, w1_t, b1, w2_t, b2):
    h = x @ w1_t + b1
    h = 0.5 * h * (1.0 + jax.lax.erf(h / math.sqrt(2.0)))
    return h @ w2_t + b2


def _normalize_ref(x):
    return x / jnp.maximum(jnp.linalg.norm(x, axis=1, keepdims=True), 1e-12)


# ------------------------------- main ---------------------------------------

if __name__ == "__main__":
    key = jax.random.PRNGKey(0)
    k_x, k_x2, k_p = jax.random.split(key, 3)

    batch = 8
    decoder_dim = 32
    output_dim = 4  # e.g. quaternion head

    x = jax.random.normal(k_x, (batch, decoder_dim), jnp.float32)

    # --- MLP mode (output_dim != -1): pre-pad weights ONCE, reuse across calls ---
    raw_params = init_property_regressor(k_p, decoder_dim, output_dim)
    padded_params = pad_mlp_params(*raw_params)

    y = jax.block_until_ready(property_regressor_mlp(x, padded_params))
    y_ref = _mlp_ref(x, *raw_params)
    assert y.shape == (batch, output_dim)
    assert jnp.allclose(y, y_ref, atol=1e-5, rtol=1e-5)

    # --- MLP mode, multi-step batch grid (exercises pipelining + padding path) ---
    batch2 = 24
    x2 = jax.random.normal(k_x2, (batch2, decoder_dim), jnp.float32)
    y2 = jax.block_until_ready(
        property_regressor_mlp(x2, padded_params, block_b=8)
    )
    y2_ref = _mlp_ref(x2, *raw_params)
    assert y2.shape == (batch2, output_dim)
    assert jnp.allclose(y2, y2_ref, atol=1e-5, rtol=1e-5)

    # --- optional bf16 MXU-operand path (f32 accumulation, relaxed tolerance) ---
    y_bf16 = jax.block_until_ready(
        property_regressor_mlp(x, padded_params, matmul_dtype=jnp.bfloat16)
    )
    assert y_bf16.shape == (batch, output_dim)
    assert jnp.allclose(y_bf16, y_ref, atol=1e-1, rtol=1e-1)

    # --- just_normalize mode (output_dim == -1) ---
    z = jax.block_until_ready(property_regressor_normalize(x))
    z_ref = _normalize_ref(x)
    assert z.shape == x.shape
    assert jnp.allclose(z, z_ref, atol=1e-5, rtol=1e-5)

    z2 = jax.block_until_ready(property_regressor_normalize(x2, block_b=8))
    assert z2.shape == x2.shape
    assert jnp.allclose(z2, _normalize_ref(x2), atol=1e-5, rtol=1e-5)

    print("KERNEL_OK")
</pallas_src>

<mosaic_0001>
module attributes {stable_mosaic.version = 11 : i64} {
  func.func @kernel(%arg0: i32, %arg1: memref<8x128xf32, #tpu.memory_space<vmem>>, %arg2: memref<128x128xf32, #tpu.memory_space<vmem>>, %arg3: memref<1x128xf32, #tpu.memory_space<vmem>>, %arg4: memref<128x128xf32, #tpu.memory_space<vmem>>, %arg5: memref<1x128xf32, #tpu.memory_space<vmem>>, %arg6: memref<8x128xf32, #tpu.memory_space<vmem>>) attributes {dimension_semantics = [#tpu.dimension_semantics<parallel>], iteration_bounds = array<i64: 1>, scalar_prefetch = 0 : i64, scratch_operands = 0 : i64, tpu.core_type = #tpu.core_type<tc>, window_params = [{transform_indices = @transform_0, window_bounds = array<i64: 8, 128>}, {pipeline_mode = #tpu.pipeline_mode<synchronous>, transform_indices = @transform_1, window_bounds = array<i64: 128, 128>}, {pipeline_mode = #tpu.pipeline_mode<synchronous>, transform_indices = @transform_2, window_bounds = array<i64: 1, 128>}, {pipeline_mode = #tpu.pipeline_mode<synchronous>, transform_indices = @transform_3, window_bounds = array<i64: 128, 128>}, {pipeline_mode = #tpu.pipeline_mode<synchronous>, transform_indices = @transform_4, window_bounds = array<i64: 1, 128>}, {transform_indices = @transform_5, window_bounds = array<i64: 8, 128>}]} {
    %c0 = arith.constant 0 : index
    %c0_0 = arith.constant 0 : index
    %0 = vector.load %arg1[%c0, %c0_0] : memref<8x128xf32, #tpu.memory_space<vmem>>, vector<8x128xf32>
    %c0_1 = arith.constant 0 : index
    %c0_2 = arith.constant 0 : index
    %1 = vector.load %arg2[%c0_1, %c0_2] : memref<128x128xf32, #tpu.memory_space<vmem>>, vector<128x128xf32>
    %c0_3 = arith.constant 0 : index
    %c0_4 = arith.constant 0 : index
    %2 = vector.load %arg4[%c0_3, %c0_4] : memref<128x128xf32, #tpu.memory_space<vmem>>, vector<128x128xf32>
    %cst = arith.constant dense<0.000000e+00> : vector<8x128xf32>
    %3 = tpu.matmul %0, %1, %cst {dimension_numbers = #tpu.dot_dimension_numbers<[1], [0], [0], [1], [0, 0, 1, 1], [], []>} : vector<8x128xf32>, vector<128x128xf32>, vector<8x128xf32> -> vector<8x128xf32>
    %c0_5 = arith.constant 0 : index
    %c0_6 = arith.constant 0 : index
    %4 = vector.load %arg3[%c0_5, %c0_6] : memref<1x128xf32, #tpu.memory_space<vmem>>, vector<1x128xf32>
    %5 = vector.broadcast %4 : vector<1x128xf32> to vector<8x128xf32>
    %6 = arith.addf %3, %5 : vector<8x128xf32>
    %cst_7 = arith.constant 5.000000e-01 : f32
    %7 = vector.broadcast %cst_7 : f32 to vector<8x128xf32>
    %8 = arith.mulf %7, %6 : vector<8x128xf32>
    %cst_8 = arith.constant 0.707106769 : f32
    %9 = vector.broadcast %cst_8 : f32 to vector<8x128xf32>
    %10 = arith.mulf %6, %9 : vector<8x128xf32>
    %11 = math.erf %10 : vector<8x128xf32>
    %cst_9 = arith.constant 1.000000e+00 : f32
    %12 = vector.broadcast %cst_9 : f32 to vector<8x128xf32>
    %13 = arith.addf %12, %11 : vector<8x128xf32>
    %14 = arith.mulf %8, %13 : vector<8x128xf32>
    %cst_10 = arith.constant dense<0.000000e+00> : vector<8x128xf32>
    %15 = tpu.matmul %14, %2, %cst_10 {dimension_numbers = #tpu.dot_dimension_numbers<[1], [0], [0], [1], [0, 0, 1, 1], [], []>} : vector<8x128xf32>, vector<128x128xf32>, vector<8x128xf32> -> vector<8x128xf32>
    %c0_11 = arith.constant 0 : index
    %c0_12 = arith.constant 0 : index
    %16 = vector.load %arg5[%c0_11, %c0_12] : memref<1x128xf32, #tpu.memory_space<vmem>>, vector<1x128xf32>
    %17 = vector.broadcast %16 : vector<1x128xf32> to vector<8x128xf32>
    %18 = arith.addf %15, %17 : vector<8x128xf32>
    %c0_13 = arith.constant 0 : index
    %c0_14 = arith.constant 0 : index
    %19 = vector.load %arg6[%c0_13, %c0_14] : memref<8x128xf32, #tpu.memory_space<vmem>>, vector<8x128xf32>
    tpu.vector_store %arg6[%c0_13, %c0_14], %18 {strides = array<i32>} : memref<8x128xf32, #tpu.memory_space<vmem>>, vector<8x128xf32>,
    return
  }
  func.func @transform_0(%arg0: i32) -> (i32, i32) {
    %c0_i32 = arith.constant 0 : i32
    %c0_i32_0 = arith.constant 0 : i32
    return %arg0, %c0_i32 : i32, i32
  }
  func.func @transform_1(%arg0: i32) -> (i32, i32) {
    %c0_i32 = arith.constant 0 : i32
    %c0_i32_0 = arith.constant 0 : i32
    %c0_i32_1 = arith.constant 0 : i32
    return %c0_i32, %c0_i32_0 : i32, i32
  }
  func.func @transform_2(%arg0: i32) -> (i32, i32) {
    %c0_i32 = arith.constant 0 : i32
    %c0_i32_0 = arith.constant 0 : i32
    %c0_i32_1 = arith.constant 0 : i32
    return %c0_i32, %c0_i32_0 : i32, i32
  }
  func.func @transform_3(%arg0: i32) -> (i32, i32) {
    %c0_i32 = arith.constant 0 : i32
    %c0_i32_0 = arith.constant 0 : i32
    %c0_i32_1 = arith.constant 0 : i32
    return %c0_i32, %c0_i32_0 : i32, i32
  }
  func.func @transform_4(%arg0: i32) -> (i32, i32) {
    %c0_i32 = arith.constant 0 : i32
    %c0_i32_0 = arith.constant 0 : i32
    %c0_i32_1 = arith.constant 0 : i32
    return %c0_i32, %c0_i32_0 : i32, i32
  }
  func.func @transform_5(%arg0: i32) -> (i32, i32) {
    %c0_i32 = arith.constant 0 : i32
    %c0_i32_0 = arith.constant 0 : i32
    return %arg0, %c0_i32 : i32, i32
  }
}

</mosaic_0001>

<llo_original>
// kernel: tpu_custom_call.1
$region0: #{tpu_custom_call.1}
  #allocation0 [shape = 'u32[]', space=smem, size = 0x4, offset = 0x4, fixed_abs, tag = 'smem constant byte address 0x4 - core index']
  #allocation1 [shape = 'u32[144,128]{1,0:T(1,128)}', space=vmem, size = 0x12000, scoped, tag = 'internal scratch']
  %s0 = inlined_call_operand.hbm [shape: f32[8,128], index: 0, kind: input, shape index: {}]
  %s1 = inlined_call_operand.hbm [shape: f32[128,128], index: 1, kind: input, shape index: {}]
  %s2 = inlined_call_operand.vmem [shape: f32[1,128], index: 2, kind: input, shape index: {}]
  %s3 = inlined_call_operand.hbm [shape: f32[128,128], index: 3, kind: input, shape index: {}]
  %s4 = inlined_call_operand.vmem [shape: f32[1,128], index: 4, kind: input, shape index: {}]
  %s5 = inlined_call_operand.hbm [shape: f32[8,128], index: 5, kind: output, shape index: {}]
  %s6 = sld [smem:[#allocation0]]
  $region42: #{tpu_custom_call.1} parent=0
    _
  %s8 = ssub.s32 1, %s6
  %s9 = scalar_select 0, %s8, %s6
  $region1: #{tpu_custom_call.1} parent=0
    #allocation2 [shape = 'u8[4096]{0}', space=vmem, size = 0x1000, scoped, tag = 'input window, operand 0, single buffered']
    #allocation3 [shape = 's32[1]{0}', space=sflag, size = 0x4, scoped, tag = 'scoped memory for tpu_custom_call.1']
    #allocation4 [shape = 's32[1]{0}', space=sflag, size = 0x4, scoped, tag = 'scoped memory for tpu_custom_call.1']
    #allocation5 [shape = 'u8[65536]{0}', space=vmem, size = 0x10000, scoped, tag = 'input window, operand 1, single buffered']
    #allocation6 [shape = 's32[1]{0}', space=sflag, size = 0x4, scoped, tag = 'scoped memory for tpu_custom_call.1']
    #allocation7 [shape = 'u8[65536]{0}', space=vmem, size = 0x10000, scoped, tag = 'input window, operand 3, single buffered']
    #allocation8 [shape = 'u8[4096]{0}', space=vmem, size = 0x1000, scoped, tag = 'output window, operand 0, single buffered']
    %10 = vsyncpa [#allocation3], 0
    %11 = vsyncpa [#allocation6], 0
    %12 = vsyncpa [#allocation4], 0
    // Predicated region
    $region2: #{tpu_custom_call.1} parent=1 // pred_check
      _
    $region3: #{tpu_custom_call.1} parent=1 // pred_check_branch
      %14 = sbr.rel (0) target = $region5
    $region4: #{tpu_custom_call.1} parent=1 // pred_region
      %s16 = ssub.s32 128, 128
      %17 = vsyncadd [#allocation3], %s16
      %s19 = sshll.u32 [#allocation2], 4
      %s20 = int_to_ptr.vmem [resolvable:$true] %s19
      %22 = dma.hbm_to_vmem [thread:$0]  %s0, 128, %s20, [#allocation3]
    $region5: #{tpu_custom_call.1} parent=1 // pred_fallthru
      _
    // Predicated region
    $region6: #{tpu_custom_call.1} parent=1 // pred_check
      _
    $region7: #{tpu_custom_call.1} parent=1 // pred_check_branch
      %24 = sbr.rel (0) target = $region9
    $region8: #{tpu_custom_call.1} parent=1 // pred_region
      %s26 = ssub.s32 2048, 2048
      %27 = vsyncadd [#allocation6], %s26
      %s28 = sshll.u32 [#allocation5], 4
      %s29 = int_to_ptr.vmem [resolvable:$true] %s28
      %34 = dma.hbm_to_vmem [thread:$0]  %s1, 2048, %s29, [#allocation6], 128, 128, 8
    $region9: #{tpu_custom_call.1} parent=1 // pred_fallthru
      _
    // Predicated region
    $region10: #{tpu_custom_call.1} parent=1 // pred_check
      _
    $region11: #{tpu_custom_call.1} parent=1 // pred_check_branch
      %36 = sbr.rel (0) target = $region13
    $region12: #{tpu_custom_call.1} parent=1 // pred_region
      _
    $region13: #{tpu_custom_call.1} parent=1 // pred_fallthru
      _
    // Predicated region
    $region14: #{tpu_custom_call.1} parent=1 // pred_check
      _
    $region15: #{tpu_custom_call.1} parent=1 // pred_check_branch
      %38 = sbr.rel (0) target = $region17
    $region16: #{tpu_custom_call.1} parent=1 // pred_region
      %s40 = ssub.s32 2048, 2048
      %41 = vsyncadd [#allocation6], %s40
      %s42 = sshll.u32 [#allocation7], 4
      %s43 = int_to_ptr.vmem [resolvable:$true] %s42
      %48 = dma.hbm_to_vmem [thread:$0]  %s3, 2048, %s43, [#allocation6], 128, 128, 8
    $region17: #{tpu_custom_call.1} parent=1 // pred_fallthru
      _
    // Predicated region
    $region18: #{tpu_custom_call.1} parent=1 // pred_check
      _
    $region19: #{tpu_custom_call.1} parent=1 // pred_check_branch
      %50 = sbr.rel (0) target = $region21
    $region20: #{tpu_custom_call.1} parent=1 // pred_region
      _
    $region21: #{tpu_custom_call.1} parent=1 // pred_fallthru
      _
    // Predicated region
    $region22: #{tpu_custom_call.1} parent=1 // pred_check
      _
    $region23: #{tpu_custom_call.1} parent=1 // pred_check_branch
      %52 = sbr.rel (0) target = $region25
    $region24: #{tpu_custom_call.1} parent=1 // pred_region
      %53 = dma.done [#allocation3], 128
    $region25: #{tpu_custom_call.1} parent=1 // pred_fallthru
      _
    // Predicated region
    $region26: #{tpu_custom_call.1} parent=1 // pred_check
      _
    $region27: #{tpu_custom_call.1} parent=1 // pred_check_branch
      %55 = sbr.rel (0) target = $region29
    $region28: #{tpu_custom_call.1} parent=1 // pred_region
      %56 = dma.done [#allocation6], 2048
    $region29: #{tpu_custom_call.1} parent=1 // pred_fallthru
      _
    // Predicated region
    $region30: #{tpu_custom_call.1} parent=1 // pred_check
      _
    $region31: #{tpu_custom_call.1} parent=1 // pred_check_branch
      %58 = sbr.rel (0) target = $region33
    $region32: #{tpu_custom_call.1} parent=1 // pred_region
      %59 = dma.done [#allocation6], 2048
    $region33: #{tpu_custom_call.1} parent=1 // pred_fallthru
      _
    %v60 = vld [vmem:[#allocation2] sm:$0xff]
    %v61 = vld [vmem:[#allocation5] sm:$0xff]
    %v62 = vld [vmem:[#allocation5 + $0x8] sm:$0xff]
    %v63 = vld [vmem:[#allocation5 + $0x10] sm:$0xff]
    %v64 = vld [vmem:[#allocation5 + $0x18] sm:$0xff]
    %v65 = vld [vmem:[#allocation5 + $0x20] sm:$0xff]
    %v66 = vld [vmem:[#allocation5 + $0x28] sm:$0xff]
    %v67 = vld [vmem:[#allocation5 + $0x30] sm:$0xff]
    %v68 = vld [vmem:[#allocation5 + $0x38] sm:$0xff]
    %v69 = vld [vmem:[#allocation5 + $0x40] sm:$0xff]
    %v70 = vld [vmem:[#allocation5 + $0x48] sm:$0xff]
    %v71 = vld [vmem:[#allocation5 + $0x50] sm:$0xff]
    %v72 = vld [vmem:[#allocation5 + $0x58] sm:$0xff]
    %v73 = vld [vmem:[#allocation5 + $0x60] sm:$0xff]
    %v74 = vld [vmem:[#allocation5 + $0x68] sm:$0xff]
    %v75 = vld [vmem:[#allocation5 + $0x70] sm:$0xff]
    %v76 = vld [vmem:[#allocation5 + $0x78] sm:$0xff]
    %v77 = vld [vmem:[#allocation7] sm:$0xff]
    %v78 = vld [vmem:[#allocation7 + $0x8] sm:$0xff]
    %v79 = vld [vmem:[#allocation7 + $0x10] sm:$0xff]
    %v80 = vld [vmem:[#allocation7 + $0x18] sm:$0xff]
    %v81 = vld [vmem:[#allocation7 + $0x20] sm:$0xff]
    %v82 = vld [vmem:[#allocation7 + $0x28] sm:$0xff]
    %v83 = vld [vmem:[#allocation7 + $0x30] sm:$0xff]
    %v84 = vld [vmem:[#allocation7 + $0x38] sm:$0xff]
    %v85 = vld [vmem:[#allocation7 + $0x40] sm:$0xff]
    %v86 = vld [vmem:[#allocation7 + $0x48] sm:$0xff]
    %v87 = vld [vmem:[#allocation7 + $0x50] sm:$0xff]
    %v88 = vld [vmem:[#allocation7 + $0x58] sm:$0xff]
    %v89 = vld [vmem:[#allocation7 + $0x60] sm:$0xff]
    %v90 = vld [vmem:[#allocation7 + $0x68] sm:$0xff]
    %v91 = vld [vmem:[#allocation7 + $0x70] sm:$0xff]
    %v92 = vld [vmem:[#allocation7 + $0x78] sm:$0xff]
    %v93 = vld [vmem:[%s2] sm:$0x1]
    %v95 = vlaneseq
    %v96 = vshrl.u32 %v95, 7
    %v97 = vsub.s32 0, %v96
    %v98 = vrot.slane %v93, %v97
    %100 = vmatprep.subr.mxu0 0.0
    %101 = vmatpush1.msra.mxu0 %v76
    %102 = vmatprep.subr.mxu0 0.0
    %103 = vmatpush1.msra.mxu0 %v75
    %104 = vmatprep.subr.mxu0 0.0
    %105 = vmatpush1.msra.mxu0 %v74
    %106 = vmatprep.subr.mxu0 0.0
    %107 = vmatpush1.msra.mxu0 %v73
    %108 = vmatprep.subr.mxu0 0.0
    %109 = vmatpush1.msra.mxu0 %v72
    %110 = vmatprep.subr.mxu0 0.0
    %111 = vmatpush1.msra.mxu0 %v71
    %112 = vmatprep.subr.mxu0 0.0
    %113 = vmatpush1.msra.mxu0 %v70
    %114 = vmatprep.subr.mxu0 0.0
    %115 = vmatpush1.msra.mxu0 %v69
    %116 = vmatprep.subr.mxu0 0.0
    %117 = vmatpush1.msra.mxu0 %v68
    %118 = vmatprep.subr.mxu0 0.0
    %119 = vmatpush1.msra.mxu0 %v67
    %120 = vmatprep.subr.mxu0 0.0
    %121 = vmatpush1.msra.mxu0 %v66
    %122 = vmatprep.subr.mxu0 0.0
    %123 = vmatpush1.msra.mxu0 %v65
    %124 = vmatprep.subr.mxu0 0.0
    %125 = vmatpush1.msra.mxu0 %v64
    %126 = vmatprep.subr.mxu0 0.0
    %127 = vmatpush1.msra.mxu0 %v63
    %128 = vmatprep.subr.mxu0 0.0
    %129 = vmatpush1.msra.mxu0 %v62
    %130 = vmatprep.subr.mxu0 0.0
    %131 = vmatpush1.msra.mxu0 %v61
    %132 = vmatprep.subr.mxu0 0.0
    %133 = vmatpush2.msra.mxu0 0.0
    %134 = vmatprep.subr.mxu0 0.0
    %135 = vmatpush2.msra.mxu0 0.0
    %136 = vmatprep.subr.mxu0 0.0
    %137 = vmatpush2.msra.mxu0 0.0
    %138 = vmatprep.subr.mxu0 0.0
    %139 = vmatpush2.msra.mxu0 0.0
    %140 = vmatprep.subr.mxu0 0.0
    %141 = vmatpush2.msra.mxu0 0.0
    %142 = vmatprep.subr.mxu0 0.0
    %143 = vmatpush2.msra.mxu0 0.0
    %144 = vmatprep.subr.mxu0 0.0
    %145 = vmatpush2.msra.mxu0 0.0
    %146 = vmatprep.subr.mxu0 0.0
    %147 = vmatpush2.msra.mxu0 0.0
    %148 = vmatprep.subr.mxu0 0.0
    %149 = vmatpush2.msra.mxu0 0.0
    %150 = vmatprep.subr.mxu0 0.0
    %151 = vmatpush2.msra.mxu0 0.0
    %152 = vmatprep.subr.mxu0 0.0
    %153 = vmatpush2.msra.mxu0 0.0
    %154 = vmatprep.subr.mxu0 0.0
    %155 = vmatpush2.msra.mxu0 0.0
    %156 = vmatprep.subr.mxu0 0.0
    %157 = vmatpush2.msra.mxu0 0.0
    %158 = vmatprep.subr.mxu0 0.0
    %159 = vmatpush2.msra.mxu0 0.0
    %160 = vmatprep.subr.mxu0 0.0
    %161 = vmatpush2.msra.mxu0 0.0
    %162 = vmatprep.subr.mxu0 0.0
    %163 = vmatpush2.msra.mxu0 0.0
    %164 = vmatprep.mubr.f32.mxu0 0.0
    %165 = vmatmul.mubr.f32.gmra.mxu0 %v60
    %v166 = vpop.f32.mrf.mxu0
    %v167 = vadd.f32 %v98, %v166
    %v168 = vpop.f32.mrf.mxu0
    %169 = vdwg.mxu0
    %v170 = vmul.f32 %v167, 0.5
    %v171 = vmul.f32 %v167, 0.70710677
    %v172 = verf.f32.pop %v171
    %v173 = vadd.f32 %v172, 1.0
    %v174 = vmul.f32 %v170, %v173
    %v175 = vld [vmem:[%s4] sm:$0x1]
    %v177 = vlaneseq
    %v178 = vshrl.u32 %v177, 7
    %v179 = vsub.s32 0, %v178
    %v180 = vrot.slane %v175, %v179
    %182 = vmatprep.subr.mxu0 0.0
    %183 = vmatpush1.msra.mxu0 %v92
    %184 = vmatprep.subr.mxu0 0.0
    %185 = vmatpush1.msra.mxu0 %v91
    %186 = vmatprep.subr.mxu0 0.0
    %187 = vmatpush1.msra.mxu0 %v90
    %188 = vmatprep.subr.mxu0 0.0
    %189 = vmatpush1.msra.mxu0 %v89
    %190 = vmatprep.subr.mxu0 0.0
    %191 = vmatpush1.msra.mxu0 %v88
    %192 = vmatprep.subr.mxu0 0.0
    %193 = vmatpush1.msra.mxu0 %v87
    %194 = vmatprep.subr.mxu0 0.0
    %195 = vmatpush1.msra.mxu0 %v86
    %196 = vmatprep.subr.mxu0 0.0
    %197 = vmatpush1.msra.mxu0 %v85
    %198 = vmatprep.subr.mxu0 0.0
    %199 = vmatpush1.msra.mxu0 %v84
    %200 = vmatprep.subr.mxu0 0.0
    %201 = vmatpush1.msra.mxu0 %v83
    %202 = vmatprep.subr.mxu0 0.0
    %203 = vmatpush1.msra.mxu0 %v82
    %204 = vmatprep.subr.mxu0 0.0
    %205 = vmatpush1.msra.mxu0 %v81
    %206 = vmatprep.subr.mxu0 0.0
    %207 = vmatpush1.msra.mxu0 %v80
    %208 = vmatprep.subr.mxu0 0.0
    %209 = vmatpush1.msra.mxu0 %v79
    %210 = vmatprep.subr.mxu0 0.0
    %211 = vmatpush1.msra.mxu0 %v78
    %212 = vmatprep.subr.mxu0 0.0
    %213 = vmatpush1.msra.mxu0 %v77
    %214 = vmatprep.subr.mxu0 0.0
    %215 = vmatpush2.msra.mxu0 0.0
    %216 = vmatprep.subr.mxu0 0.0
    %217 = vmatpush2.msra.mxu0 0.0
    %218 = vmatprep.subr.mxu0 0.0
    %219 = vmatpush2.msra.mxu0 0.0
    %220 = vmatprep.subr.mxu0 0.0
    %221 = vmatpush2.msra.mxu0 0.0
    %222 = vmatprep.subr.mxu0 0.0
    %223 = vmatpush2.msra.mxu0 0.0
    %224 = vmatprep.subr.mxu0 0.0
    %225 = vmatpush2.msra.mxu0 0.0
    %226 = vmatprep.subr.mxu0 0.0
    %227 = vmatpush2.msra.mxu0 0.0
    %228 = vmatprep.subr.mxu0 0.0
    %229 = vmatpush2.msra.mxu0 0.0
    %230 = vmatprep.subr.mxu0 0.0
    %231 = vmatpush2.msra.mxu0 0.0
    %232 = vmatprep.subr.mxu0 0.0
    %233 = vmatpush2.msra.mxu0 0.0
    %234 = vmatprep.subr.mxu0 0.0
    %235 = vmatpush2.msra.mxu0 0.0
    %236 = vmatprep.subr.mxu0 0.0
    %237 = vmatpush2.msra.mxu0 0.0
    %238 = vmatprep.subr.mxu0 0.0
    %239 = vmatpush2.msra.mxu0 0.0
    %240 = vmatprep.subr.mxu0 0.0
    %241 = vmatpush2.msra.mxu0 0.0
    %242 = vmatprep.subr.mxu0 0.0
    %243 = vmatpush2.msra.mxu0 0.0
    %244 = vmatprep.subr.mxu0 0.0
    %245 = vmatpush2.msra.mxu0 0.0
    %246 = vmatprep.mubr.f32.mxu0 0.0
    %247 = vmatmul.mubr.f32.gmra.mxu0 %v174
    %v248 = vpop.f32.mrf.mxu0
    %v249 = vadd.f32 %v180, %v248
    %v250 = vpop.f32.mrf.mxu0
    %251 = vdwg.mxu0
    %252 = vst [vmem:[#allocation8] sm:$0xff] %v249
    // Predicated region
    $region34: #{tpu_custom_call.1} parent=1 // pred_check
      _
    $region35: #{tpu_custom_call.1} parent=1 // pred_check_branch
      %254 = sbr.rel (0) target = $region37
    $region36: #{tpu_custom_call.1} parent=1 // pred_region
      %s256 = ssub.s32 128, 128
      %257 = vsyncadd [#allocation4], %s256
      %s259 = sshll.u32 [#allocation8], 4
      %s260 = int_to_ptr.vmem [resolvable:$true] %s259
      %262 = dma.vmem_to_hbm [thread:$0]  %s260, 128, %s5, [#allocation4]
    $region37: #{tpu_custom_call.1} parent=1 // pred_fallthru
      _
    // Predicated region
    $region38: #{tpu_custom_call.1} parent=1 // pred_check
      _
    $region39: #{tpu_custom_call.1} parent=1 // pred_check_branch
      %264 = sbr.rel (0) target = $region41
    $region40: #{tpu_custom_call.1} parent=1 // pred_region
      %265 = dma.done [#allocation4], 128
    $region41: #{tpu_custom_call.1} parent=1 // pred_fallthru
      _
    %266 = vsyncpa [#allocation3], 1
    %267 = vsyncpa [#allocation6], 1
    %268 = vsyncpa [#allocation4], 1

</llo_original>
